<compile_context>
chip_gen: v6e
topology: v6e:2x2x1
jax: 0.10.0
libtpu: 0.0.40
codegen_flags: <defaults>
</compile_context>

<pallas_src>
import jax
import jax.numpy as jnp
from jax.experimental import pallas as pl
from jax.experimental.pallas import tpu as pltpu


def _mscam_right_kernel(x_ref,      # (1, C, T)   input tile (one batch, HW tile)
                        left_ref,   # (1, C, 1)   precomputed left-branch output
                        w3_ref,     # (Cr, C)     right squeeze (conv+BN folded)
                        b3_ref,     # (Cr, 1)
                        w4_ref,     # (C, Cr)     right excite  (conv+BN folded)
                        b4_ref,     # (C, 1)
                        o_ref):     # (1, C, T)
    x = x_ref[0]                                                       # (C, T)

    # Right branch: per-pixel 1x1 conv -> relu -> 1x1 conv (contract over C).
    rh = jnp.dot(w3_ref[...], x, preferred_element_type=jnp.float32)
    rh = jnp.maximum(rh + b3_ref[...], 0.0)                            # (Cr, T)
    right = jnp.dot(w4_ref[...], rh, preferred_element_type=jnp.float32)
    right = right + b4_ref[...] + left_ref[0]                          # (C, T)

    # Fuse: sigmoid gate and multiply with the input (in place; minimal temps).
    gate = jax.nn.sigmoid(right)
    o_ref[0] = (x.astype(jnp.float32) * gate).astype(o_ref.dtype)


def _fold_bn(w, b, gamma, beta, mean, var, eps=1e-5):
    """Fold inference-mode BatchNorm into a 1x1-conv matmul weight/bias.

    w: (Cin, Cout) matmul weight, b: (Cout,) conv bias.
    Returns folded (Cin, Cout), (Cout,).
    """
    scale = gamma / jnp.sqrt(var + eps)
    wf = w * scale[None, :]
    bf = b * scale + (beta - mean * scale)
    return wf, bf


def _pick_block_hw(hw, c, itemsize, budget_bytes=8 << 20):
    """Largest multiple-of-128 HW tile that divides HW and fits a VMEM budget."""
    best = None
    per_elem = 4 * itemsize + 4 * 4   # 2x double-buffered in/out + f32 temps
    t = 128
    while t <= hw:
        if hw % t == 0 and c * t * per_elem <= budget_bytes:
            best = t
        t += 128
    return best if best is not None else hw


def mscam_fusion(x_nchw, params, block_hw=None):
    """Run MSCAMFusion.  x_nchw: (B, C, H, W) float32 (NCHW, native layout)."""
    B, C, H, W = x_nchw.shape
    HW = H * W
    (w1, b1), (w2, b2), (w3, b3), (w4, b4) = params
    Cr = w1.shape[1]

    x = x_nchw.reshape(B, C, HW)                      # free reshape, no transpose

    # Left branch (global average pool + squeeze/excite on a (B, C) vector):
    # tiny, hoisted out of the kernel so HW has no cross-tile dependency.
    gap = jnp.mean(x, axis=2)                         # (B, C)
    left = jnp.maximum(gap @ w1 + b1, 0.0) @ w2 + b2  # (B, C)
    left = left[:, :, None].astype(jnp.float32)       # (B, C, 1)

    # Right-branch weights in "contract over C" orientation for (C, HW) tiles.
    w3k = jnp.transpose(w3)                           # (Cr, C)
    w4k = jnp.transpose(w4)                           # (C, Cr)
    b3k = b3.reshape(Cr, 1)
    b4k = b4.reshape(C, 1)

    if block_hw is None:
        block_hw = _pick_block_hw(HW, C, x.dtype.itemsize)
    assert HW % block_hw == 0, (HW, block_hw)
    n_hw = HW // block_hw

    # Explicit VMEM limit sized to the double-buffered tile footprint + weights
    # + f32 intermediates, with headroom; clamped so it stays v7x (64 MiB) safe.
    tile_bytes = C * block_hw * x.dtype.itemsize
    w_bytes = 4 * (2 * Cr * C + Cr + 3 * C)
    vmem_needed = 4 * tile_bytes + 2 * w_bytes + 4 * C * block_hw * 4
    vmem_limit = int(min(max(vmem_needed + (1 << 20), 16 << 20), 48 << 20))

    const_spec = lambda shape: pl.BlockSpec(shape, lambda b, t: (0,) * len(shape))
    # TODO(synk): on v7x with very large C, single-buffer the constant-index
    # weight blocks (pipeline_mode=pl.Buffered(1)) to halve their VMEM use.

    out = pl.pallas_call(
        _mscam_right_kernel,
        out_shape=jax.ShapeDtypeStruct((B, C, HW), x.dtype),
        grid_spec=pltpu.PrefetchScalarGridSpec(
            num_scalar_prefetch=0,
            grid=(B, n_hw),
            in_specs=[
                pl.BlockSpec((1, C, block_hw), lambda b, t: (b, 0, t)),
                pl.BlockSpec((1, C, 1), lambda b, t: (b, 0, 0)),
                const_spec((Cr, C)), const_spec((Cr, 1)),
                const_spec((C, Cr)), const_spec((C, 1)),
            ],
            out_specs=pl.BlockSpec((1, C, block_hw), lambda b, t: (b, 0, t)),
        ),
        compiler_params=pltpu.CompilerParams(
            dimension_semantics=("parallel", "parallel"),
            vmem_limit_bytes=vmem_limit),
    )(x, left, w3k, b3k, w4k, b4k)

    return out.reshape(B, C, H, W)


def make_params(key, C, r=4):
    """Deterministically build the module's parameters and fold BN into convs."""
    Cr = C // r
    keys = jax.random.split(key, 16)

    def conv_w(k, cin, cout):
        # PyTorch Conv2d weight is (cout, cin, 1, 1); stored in matmul form (cin, cout).
        return 0.1 * jax.random.normal(k, (cin, cout), jnp.float32)

    def conv_b(k, cout):
        return 0.05 * jax.random.normal(k, (cout,), jnp.float32)

    def bn(k, c):
        k1, k2, k3 = jax.random.split(k, 3)
        gamma = 1.0 + 0.1 * jax.random.normal(k1, (c,), jnp.float32)
        beta = 0.05 * jax.random.normal(k2, (c,), jnp.float32)
        mean = 0.02 * jax.random.normal(k3, (c,), jnp.float32)
        var = jnp.ones((c,), jnp.float32)
        return gamma, beta, mean, var

    # left branch: point_wise_conv + bn, point_wise_conv_upsample + bn_upsample
    w1, b1 = conv_w(keys[0], C, Cr), conv_b(keys[1], Cr)
    w2, b2 = conv_w(keys[2], Cr, C), conv_b(keys[3], C)
    # right branch: point_wise_conv_original + bn_original,
    #               point_wise_conv_upsample_original + bn_original_upsample
    w3, b3 = conv_w(keys[4], C, Cr), conv_b(keys[5], Cr)
    w4, b4 = conv_w(keys[6], Cr, C), conv_b(keys[7], C)

    bn1 = bn(keys[8], Cr)
    bn2 = bn(keys[9], C)
    bn3 = bn(keys[10], Cr)
    bn4 = bn(keys[11], C)

    return (
        _fold_bn(w1, b1, *bn1),
        _fold_bn(w2, b2, *bn2),
        _fold_bn(w3, b3, *bn3),
        _fold_bn(w4, b4, *bn4),
    )


def mscam_fusion_ref(x_nchw, params):
    """Pure-JAX reference (same folded-BN parameters), NHWC path."""
    B, C, H, W = x_nchw.shape
    x = jnp.transpose(x_nchw, (0, 2, 3, 1)).reshape(B, H * W, C)
    (w1, b1), (w2, b2), (w3, b3), (w4, b4) = params

    mean = jnp.mean(x, axis=1, keepdims=True)                 # (B, 1, C)
    left = jnp.maximum(mean @ w1 + b1, 0.0) @ w2 + b2         # (B, 1, C)
    right = jnp.maximum(x @ w3 + b3, 0.0) @ w4 + b4           # (B, HW, C)
    out = x * jax.nn.sigmoid(left + right)
    return jnp.transpose(out.reshape(B, H, W, C), (0, 3, 1, 2))


if __name__ == "__main__":
    B, C, H, W = 2, 8, 16, 16
    r = 4

    key = jax.random.PRNGKey(0)
    k_x, k_p = jax.random.split(key)
    x = jax.random.normal(k_x, (B, C, H, W), jnp.float32)
    params = make_params(k_p, C, r)

    # block_hw=128 exercises the (B, HW-tiles) tiled/parallel path (HW=256).
    out = jax.block_until_ready(mscam_fusion(x, params, block_hw=128))
    ref = jax.block_until_ready(mscam_fusion_ref(x, params))

    assert out.shape == (B, C, H, W), out.shape
    assert jnp.allclose(out, ref, atol=1e-5, rtol=1e-5), "mismatch vs reference"
    print("KERNEL_OK")
</pallas_src>

<mosaic_0001>
module attributes {stable_mosaic.version = 11 : i64} {
  func.func @_mscam_right_kernel(%arg0: i32, %arg1: i32, %arg2: memref<1x8x128xf32, #tpu.memory_space<vmem>>, %arg3: memref<1x8x1xf32, #tpu.memory_space<vmem>>, %arg4: memref<2x8xf32, #tpu.memory_space<vmem>>, %arg5: memref<2x1xf32, #tpu.memory_space<vmem>>, %arg6: memref<8x2xf32, #tpu.memory_space<vmem>>, %arg7: memref<8x1xf32, #tpu.memory_space<vmem>>, %arg8: memref<1x8x128xf32, #tpu.memory_space<vmem>>) attributes {dimension_semantics = [#tpu.dimension_semantics<parallel>, #tpu.dimension_semantics<parallel>], iteration_bounds = array<i64: 2, 2>, scalar_prefetch = 0 : i64, scratch_operands = 0 : i64, tpu.core_type = #tpu.core_type<tc>, window_params = [{transform_indices = @transform_0, window_bounds = array<i64: 1, 8, 128>}, {transform_indices = @transform_1, window_bounds = array<i64: 1, 8, 1>}, {pipeline_mode = #tpu.pipeline_mode<synchronous>, transform_indices = @transform_2, window_bounds = array<i64: 2, 8>}, {pipeline_mode = #tpu.pipeline_mode<synchronous>, transform_indices = @transform_3, window_bounds = array<i64: 2, 1>}, {pipeline_mode = #tpu.pipeline_mode<synchronous>, transform_indices = @transform_4, window_bounds = array<i64: 8, 2>}, {pipeline_mode = #tpu.pipeline_mode<synchronous>, transform_indices = @transform_5, window_bounds = array<i64: 8, 1>}, {transform_indices = @transform_6, window_bounds = array<i64: 1, 8, 128>}]} {
    %c0 = arith.constant 0 : index
    %c0_0 = arith.constant 0 : index
    %c0_1 = arith.constant 0 : index
    %0 = vector.load %arg2[%c0, %c0_0, %c0_1] : memref<1x8x128xf32, #tpu.memory_space<vmem>>, vector<1x8x128xf32>
    %1 = vector.shape_cast %0 : vector<1x8x128xf32> to vector<8x128xf32>
    %c0_2 = arith.constant 0 : index
    %c0_3 = arith.constant 0 : index
    %2 = vector.load %arg4[%c0_2, %c0_3] : memref<2x8xf32, #tpu.memory_space<vmem>>, vector<2x8xf32>
    %cst = arith.constant dense<0.000000e+00> : vector<2x128xf32>
    %3 = tpu.matmul %2, %1, %cst {dimension_numbers = #tpu.dot_dimension_numbers<[1], [0], [0], [1], [0, 0, 1, 1], [], []>} : vector<2x8xf32>, vector<8x128xf32>, vector<2x128xf32> -> vector<2x128xf32>
    %c0_4 = arith.constant 0 : index
    %c0_5 = arith.constant 0 : index
    %4 = vector.load %arg5[%c0_4, %c0_5] : memref<2x1xf32, #tpu.memory_space<vmem>>, vector<2x1xf32>
    %5 = vector.broadcast %4 : vector<2x1xf32> to vector<2x128xf32>
    %6 = arith.addf %3, %5 : vector<2x128xf32>
    %cst_6 = arith.constant 0.000000e+00 : f32
    %7 = vector.broadcast %cst_6 : f32 to vector<2x128xf32>
    %8 = arith.maximumf %6, %7 : vector<2x128xf32>
    %c0_7 = arith.constant 0 : index
    %c0_8 = arith.constant 0 : index
    %9 = vector.load %arg6[%c0_7, %c0_8] : memref<8x2xf32, #tpu.memory_space<vmem>>, vector<8x2xf32>
    %cst_9 = arith.constant dense<0.000000e+00> : vector<8x128xf32>
    %10 = tpu.matmul %9, %8, %cst_9 {dimension_numbers = #tpu.dot_dimension_numbers<[1], [0], [0], [1], [0, 0, 1, 1], [], []>} : vector<8x2xf32>, vector<2x128xf32>, vector<8x128xf32> -> vector<8x128xf32>
    %c0_10 = arith.constant 0 : index
    %c0_11 = arith.constant 0 : index
    %11 = vector.load %arg7[%c0_10, %c0_11] : memref<8x1xf32, #tpu.memory_space<vmem>>, vector<8x1xf32>
    %12 = vector.broadcast %11 : vector<8x1xf32> to vector<8x128xf32>
    %13 = arith.addf %10, %12 : vector<8x128xf32>
    %c0_12 = arith.constant 0 : index
    %c0_13 = arith.constant 0 : index
    %c0_14 = arith.constant 0 : index
    %14 = vector.load %arg3[%c0_12, %c0_13, %c0_14] : memref<1x8x1xf32, #tpu.memory_space<vmem>>, vector<1x8x1xf32>
    %15 = vector.shape_cast %14 : vector<1x8x1xf32> to vector<8x1xf32>
    %16 = vector.broadcast %15 : vector<8x1xf32> to vector<8x128xf32>
    %17 = arith.addf %13, %16 : vector<8x128xf32>
    %18 = arith.negf %17 : vector<8x128xf32>
    %19 = math.exp %18 : vector<8x128xf32>
    %cst_15 = arith.constant 1.000000e+00 : f32
    %20 = vector.broadcast %cst_15 : f32 to vector<8x128xf32>
    %21 = arith.addf %20, %19 : vector<8x128xf32>
    %22 = arith.divf %20, %21 : vector<8x128xf32>
    %23 = arith.mulf %1, %22 : vector<8x128xf32>
    %c0_16 = arith.constant 0 : index
    %c0_17 = arith.constant 0 : index
    %c0_18 = arith.constant 0 : index
    %24 = vector.load %arg8[%c0_16, %c0_17, %c0_18] : memref<1x8x128xf32, #tpu.memory_space<vmem>>, vector<1x8x128xf32>
    %25 = vector.shape_cast %24 : vector<1x8x128xf32> to vector<8x128xf32>
    %26 = vector.shape_cast %23 : vector<8x128xf32> to vector<1x8x128xf32>
    tpu.vector_store %arg8[%c0_16, %c0_17, %c0_18], %26 {strides = array<i32>} : memref<1x8x128xf32, #tpu.memory_space<vmem>>, vector<1x8x128xf32>,
    return
  }
  func.func @transform_0(%arg0: i32, %arg1: i32) -> (i32, i32, i32) {
    %c0_i32 = arith.constant 0 : i32
    %c0_i32_0 = arith.constant 0 : i32
    return %arg0, %c0_i32, %arg1 : i32, i32, i32
  }
  func.func @transform_1(%arg0: i32, %arg1: i32) -> (i32, i32, i32) {
    %c0_i32 = arith.constant 0 : i32
    %c0_i32_0 = arith.constant 0 : i32
    %c0_i32_1 = arith.constant 0 : i32
    return %arg0, %c0_i32, %c0_i32_0 : i32, i32, i32
  }
  func.func @transform_2(%arg0: i32, %arg1: i32) -> (i32, i32) {
    %c0_i32 = arith.constant 0 : i32
    %c0_i32_0 = arith.constant 0 : i32
    %c0_i32_1 = arith.constant 0 : i32
    return %c0_i32, %c0_i32_0 : i32, i32
  }
  func.func @transform_3(%arg0: i32, %arg1: i32) -> (i32, i32) {
    %c0_i32 = arith.constant 0 : i32
    %c0_i32_0 = arith.constant 0 : i32
    %c0_i32_1 = arith.constant 0 : i32
    return %c0_i32, %c0_i32_0 : i32, i32
  }
  func.func @transform_4(%arg0: i32, %arg1: i32) -> (i32, i32) {
    %c0_i32 = arith.constant 0 : i32
    %c0_i32_0 = arith.constant 0 : i32
    %c0_i32_1 = arith.constant 0 : i32
    return %c0_i32, %c0_i32_0 : i32, i32
  }
  func.func @transform_5(%arg0: i32, %arg1: i32) -> (i32, i32) {
    %c0_i32 = arith.constant 0 : i32
    %c0_i32_0 = arith.constant 0 : i32
    %c0_i32_1 = arith.constant 0 : i32
    return %c0_i32, %c0_i32_0 : i32, i32
  }
  func.func @transform_6(%arg0: i32, %arg1: i32) -> (i32, i32, i32) {
    %c0_i32 = arith.constant 0 : i32
    %c0_i32_0 = arith.constant 0 : i32
    return %arg0, %c0_i32, %arg1 : i32, i32, i32
  }
}

</mosaic_0001>

<llo_original>
// kernel: tpu_custom_call.1
$region0: #{tpu_custom_call.1}
  #allocation0 [shape = 'u32[]', space=smem, size = 0x4, offset = 0x4, fixed_abs, tag = 'smem constant byte address 0x4 - core index']
  #allocation1 [shape = 'u32[144,128]{1,0:T(1,128)}', space=vmem, size = 0x12000, scoped, tag = 'internal scratch']
  %s0 = inlined_call_operand.vmem [shape: f32[2,8,256], index: 0, kind: input, shape index: {}]
  %s1 = inlined_call_operand.vmem [shape: f32[2,8,1], index: 1, kind: input, shape index: {}]
  %s2 = inlined_call_operand.vmem [shape: f32[2,8], index: 2, kind: input, shape index: {}]
  %s3 = inlined_call_operand.vmem [shape: f32[2,1], index: 3, kind: input, shape index: {}]
  %s4 = inlined_call_operand.vmem [shape: f32[8,2], index: 4, kind: input, shape index: {}]
  %s5 = inlined_call_operand.vmem [shape: f32[8,1], index: 5, kind: input, shape index: {}]
  %s6 = inlined_call_operand.hbm [shape: f32[2,8,256], index: 6, kind: output, shape index: {}]
  %s7 = sld [smem:[#allocation0]]
  $region57: #{tpu_custom_call.1} parent=0
    _
  %s9 = ssub.s32 1, %s7
  %s10 = scalar_select 0, %s9, %s7
  $region1: #{tpu_custom_call.1} parent=0
    #allocation2 [shape = 'u8[8192]{0}', space=vmem, size = 0x2000, scoped, tag = 'output window, operand 0']
    #allocation3 [shape = 's32[2]{0}', space=sflag, size = 0x8, scoped, tag = 'scoped memory for tpu_custom_call.1']
    %11 = vsyncpa [#allocation3], 0
    %s12 = scalar_lea.sflag [#allocation3], 1
    %13 = vsyncpa %s12, 0
    loop: start=0, step=1, limit=6
    $region2: #{tpu_custom_call.1} parent=1 // loop_pre_header
      _
    $region3: #{tpu_custom_call.1} parent=1 // loop_header
      %s15 = sphi 0, %s19
      %p16 = scmp.ge.s32.totalorder %s15, 6
      %s22 = sphi 0, %s34
      %s23 = sphi 0, %s30
      %s24 = sphi 0, %s22
      %s25 = sphi 0, %s23
      %s26 = sphi 0, %s24
      %s27 = sphi 0, %s25
      %s39 = sphi 0, %s41
      %s42 = sphi 0, %s39
      %s43 = sphi 0, %s42
      %s59 = sphi 0, %s43
      %s65 = sphi 0, %s67
      %s68 = sphi 0, %s65
      %s69 = sphi 0, %s68
      %s85 = sphi 0, %s69
      %s89 = sphi 0, %s89
      %s91 = sphi 0, %s89
      %s92 = sphi 0, %s91
      %s106 = sphi 0, %s92
      %s110 = sphi 0, %s110
      %s112 = sphi 0, %s110
      %s113 = sphi 0, %s112
      %s127 = sphi 0, %s113
      %s131 = sphi 0, %s131
      %s133 = sphi 0, %s131
      %s134 = sphi 0, %s133
      %s148 = sphi 0, %s134
      %s152 = sphi 0, %s152
      %s154 = sphi 0, %s152
      %s155 = sphi 0, %s154
      %s169 = sphi 0, %s155
      %s177 = sphi 0, %s179
      %s180 = sphi 0, %s177
      %s181 = sphi 0, %s180
      %s197 = sphi 0, %s181
    $region4: #{tpu_custom_call.1} parent=1 // loop_header_branch
      %18 = sbr.rel (%p16) target = $region8
    $region5: #{tpu_custom_call.1} parent=1 // loop_body
      %s20 = ssub.s32 %s15, 1
      %s21 = ssub.s32 %s15, 2
      %s28 = sadd.s32 1, %s23
      %p29 = scmp.ge.s32.totalorder %s28, 2
      %s30 = scalar_select %p29, 0, %s28
      %s31 = sadd.s32 1, %s22
      %s32 = scalar_select %p29, %s31, %s22
      %p33 = scmp.ge.s32.totalorder %s32, 2
      %s34 = scalar_select %p33, 0, %s32
      %s35 = ssub.s32 %s22, %s34
      %s36 = ssub.s32 %s23, %s30
      %s37 = sor.u32 %s35, %s36
      %p38 = scmp.eq.s32.totalorder %s37, 0
      %s40 = sadd.s32 %s39, 1
      %s41 = scalar_select %p38, %s39, %s40
      %p44 = pneg %p38
      %p45 = scmp.eq.s32.totalorder %s15, 3
      %p46 = por %p44, %p45
      %p47 = scmp.ne.s32.totalorder %s39, %s42
      %p48 = scmp.eq.s32.totalorder %s15, 0
      %p49 = por %p47, %p48
      %p50 = scmp.ne.s32.totalorder %s39, %s42
      %p51 = scmp.eq.s32.totalorder %s20, 3
      %p52 = por %p50, %p51
      %p53 = scmp.ne.s32.totalorder %s42, %s43
      %p54 = scmp.eq.s32.totalorder %s20, 0
      %p55 = por %p53, %p54
      %p56 = scmp.ne.s32.totalorder %s42, %s43
      %p57 = scmp.eq.s32.totalorder %s21, 3
      %p58 = por %p56, %p57
      %p60 = scmp.ne.s32.totalorder %s43, %s59
      %p61 = scmp.eq.s32.totalorder %s21, 0
      %p62 = por %p60, %p61
      %s63 = ssub.s32 %s22, %s34
      %p64 = scmp.eq.s32.totalorder %s63, 0
      %s66 = sadd.s32 %s65, 1
      %s67 = scalar_select %p64, %s65, %s66
      %p70 = pneg %p64
      %p71 = scmp.eq.s32.totalorder %s15, 3
      %p72 = por %p70, %p71
      %p73 = scmp.ne.s32.totalorder %s65, %s68
      %p74 = scmp.eq.s32.totalorder %s15, 0
      %p75 = por %p73, %p74
      %p76 = scmp.ne.s32.totalorder %s65, %s68
      %p77 = scmp.eq.s32.totalorder %s20, 3
      %p78 = por %p76, %p77
      %p79 = scmp.ne.s32.totalorder %s68, %s69
      %p80 = scmp.eq.s32.totalorder %s20, 0
      %p81 = por %p79, %p80
      %p82 = scmp.ne.s32.totalorder %s68, %s69
      %p83 = scmp.eq.s32.totalorder %s21, 3
      %p84 = por %p82, %p83
      %p86 = scmp.ne.s32.totalorder %s69, %s85
      %p87 = scmp.eq.s32.totalorder %s21, 0
      %p88 = por %p86, %p87
      %s90 = sadd.s32 %s89, 1
      %p93 = scmp.eq.s32.totalorder %s15, 3
      %p94 = scmp.ne.s32.totalorder %s89, %s91
      %p95 = scmp.eq.s32.totalorder %s15, 0
      %p96 = por %p94, %p95
      %p97 = scmp.ne.s32.totalorder %s89, %s91
      %p98 = scmp.eq.s32.totalorder %s20, 3
      %p99 = por %p97, %p98
      %p100 = scmp.ne.s32.totalorder %s91, %s92
      %p101 = scmp.eq.s32.totalorder %s20, 0
      %p102 = por %p100, %p101
      %p103 = scmp.ne.s32.totalorder %s91, %s92
      %p104 = scmp.eq.s32.totalorder %s21, 3
      %p105 = por %p103, %p104
      %p107 = scmp.ne.s32.totalorder %s92, %s106
      %p108 = scmp.eq.s32.totalorder %s21, 0
      %p109 = por %p107, %p108
      %s111 = sadd.s32 %s110, 1
      %p114 = scmp.eq.s32.totalorder %s15, 3
      %p115 = scmp.ne.s32.totalorder %s110, %s112
      %p116 = scmp.eq.s32.totalorder %s15, 0
      %p117 = por %p115, %p116
      %p118 = scmp.ne.s32.totalorder %s110, %s112
      %p119 = scmp.eq.s32.totalorder %s20, 3
      %p120 = por %p118, %p119
      %p121 = scmp.ne.s32.totalorder %s112, %s113
      %p122 = scmp.eq.s32.totalorder %s20, 0
      %p123 = por %p121, %p122
      %p124 = scmp.ne.s32.totalorder %s112, %s113
      %p125 = scmp.eq.s32.totalorder %s21, 3
      %p126 = por %p124, %p125
      %p128 = scmp.ne.s32.totalorder %s113, %s127
      %p129 = scmp.eq.s32.totalorder %s21, 0
      %p130 = por %p128, %p129
      %s132 = sadd.s32 %s131, 1
      %p135 = scmp.eq.s32.totalorder %s15, 3
      %p136 = scmp.ne.s32.totalorder %s131, %s133
      %p137 = scmp.eq.s32.totalorder %s15, 0
      %p138 = por %p136, %p137
      %p139 = scmp.ne.s32.totalorder %s131, %s133
      %p140 = scmp.eq.s32.totalorder %s20, 3
      %p141 = por %p139, %p140
      %p142 = scmp.ne.s32.totalorder %s133, %s134
      %p143 = scmp.eq.s32.totalorder %s20, 0
      %p144 = por %p142, %p143
      %p145 = scmp.ne.s32.totalorder %s133, %s134
      %p146 = scmp.eq.s32.totalorder %s21, 3
      %p147 = por %p145, %p146
      %p149 = scmp.ne.s32.totalorder %s134, %s148
      %p150 = scmp.eq.s32.totalorder %s21, 0
      %p151 = por %p149, %p150
      %s153 = sadd.s32 %s152, 1
      %p156 = scmp.eq.s32.totalorder %s15, 3
      %p157 = scmp.ne.s32.totalorder %s152, %s154
      %p158 = scmp.eq.s32.totalorder %s15, 0
      %p159 = por %p157, %p158
      %p160 = scmp.ne.s32.totalorder %s152, %s154
      %p161 = scmp.eq.s32.totalorder %s20, 3
      %p162 = por %p160, %p161
      %p163 = scmp.ne.s32.totalorder %s154, %s155
      %p164 = scmp.eq.s32.totalorder %s20, 0
      %p165 = por %p163, %p164
      %p166 = scmp.ne.s32.totalorder %s154, %s155
      %p167 = scmp.eq.s32.totalorder %s21, 3
      %p168 = por %p166, %p167
      %p170 = scmp.ne.s32.totalorder %s155, %s169
      %p171 = scmp.eq.s32.totalorder %s21, 0
      %p172 = por %p170, %p171
      %s173 = ssub.s32 %s22, %s34
      %s174 = ssub.s32 %s23, %s30
      %s175 = sor.u32 %s173, %s174
      %p176 = scmp.eq.s32.totalorder %s175, 0
      %s178 = sadd.s32 %s177, 1
      %s179 = scalar_select %p176, %s177, %s178
      %p182 = pneg %p176
      %p183 = scmp.eq.s32.totalorder %s15, 3
      %p184 = por %p182, %p183
      %p185 = scmp.ne.s32.totalorder %s177, %s180
      %p186 = scmp.eq.s32.totalorder %s15, 0
      %p187 = por %p185, %p186
      %p188 = scmp.ne.s32.totalorder %s177, %s180
      %p189 = scmp.eq.s32.totalorder %s20, 3
      %p190 = por %p188, %p189
      %p191 = scmp.ne.s32.totalorder %s180, %s181
      %p192 = scmp.eq.s32.totalorder %s20, 0
      %p193 = por %p191, %p192
      %p194 = scmp.ne.s32.totalorder %s180, %s181
      %p195 = scmp.eq.s32.totalorder %s21, 3
      %p196 = por %p194, %p195
      %p198 = scmp.ne.s32.totalorder %s181, %s197
      %p199 = scmp.eq.s32.totalorder %s21, 0
      %p200 = por %p198, %p199
      %p201 = scmp.le.s32.totalorder 1, %s15
      %p202 = scmp.lt.s32.totalorder %s15, 5
      %p203 = pnand %p201, %p202
      %p204 = pneg %p203
      // Predicated region
      $region9: #{tpu_custom_call.1} parent=5 // pred_check
        _
      $region10: #{tpu_custom_call.1} parent=5 // pred_check_branch
        %206 = sbr.rel (%p203) target = $region12
      $region11: #{tpu_custom_call.1} parent=5 // pred_region
        %s207 = ssub.s32 %s15, 1
        // Predicated region
        $region13: #{tpu_custom_call.1} parent=11 // pred_check
          %p208 = pneg %p102
        $region14: #{tpu_custom_call.1} parent=11 // pred_check_branch
          %210 = sbr.rel (%p208) target = $region16
        $region15: #{tpu_custom_call.1} parent=11 // pred_region
          _
        $region16: #{tpu_custom_call.1} parent=11 // pred_fallthru
          _
        // Predicated region
        $region17: #{tpu_custom_call.1} parent=11 // pred_check
          %p211 = pneg %p123
        $region18: #{tpu_custom_call.1} parent=11 // pred_check_branch
          %213 = sbr.rel (%p211) target = $region20
        $region19: #{tpu_custom_call.1} parent=11 // pred_region
          _
        $region20: #{tpu_custom_call.1} parent=11 // pred_fallthru
          _
        // Predicated region
        $region21: #{tpu_custom_call.1} parent=11 // pred_check
          %p214 = pneg %p144
        $region22: #{tpu_custom_call.1} parent=11 // pred_check_branch
          %216 = sbr.rel (%p214) target = $region24
        $region23: #{tpu_custom_call.1} parent=11 // pred_region
          _
        $region24: #{tpu_custom_call.1} parent=11 // pred_fallthru
          _
        // Predicated region
        $region25: #{tpu_custom_call.1} parent=11 // pred_check
          %p217 = pneg %p165
        $region26: #{tpu_custom_call.1} parent=11 // pred_check_branch
          %219 = sbr.rel (%p217) target = $region28
        $region27: #{tpu_custom_call.1} parent=11 // pred_region
          _
        $region28: #{tpu_custom_call.1} parent=11 // pred_fallthru
          _
      $region12: #{tpu_custom_call.1} parent=5 // pred_fallthru
        _
      %p220 = scmp.lt.s32.totalorder %s15, 4
      // Predicated region
      $region29: #{tpu_custom_call.1} parent=5 // pred_check
        %p221 = pneg %p220
      $region30: #{tpu_custom_call.1} parent=5 // pred_check_branch
        %223 = sbr.rel (%p221) target = $region32
      $region31: #{tpu_custom_call.1} parent=5 // pred_region
        // Predicated region
        $region33: #{tpu_custom_call.1} parent=31 // pred_check
          %p224 = pneg %p49
        $region34: #{tpu_custom_call.1} parent=31 // pred_check_branch
          %226 = sbr.rel (%p224) target = $region36
        $region35: #{tpu_custom_call.1} parent=31 // pred_region
          %p227 = scmp.lt.s32.totalorder %s22, 1
          %s228 = scalar_select %p227, %s22, 1
          %p229 = scmp.lt.s32.totalorder %s23, 1
          %s230 = scalar_select %p229, %s23, 1
          %s231 = smul.addr %s228, 2
          %s232 = sadd.s32 %s230, %s231
          %s233 = smul.addr %s232, 8
          %s234 = scalar_lea.vmem %s0, %s233
        $region36: #{tpu_custom_call.1} parent=31 // pred_fallthru
          _
        // Predicated region
        $region37: #{tpu_custom_call.1} parent=31 // pred_check
          %p235 = pneg %p75
        $region38: #{tpu_custom_call.1} parent=31 // pred_check_branch
          %237 = sbr.rel (%p235) target = $region40
        $region39: #{tpu_custom_call.1} parent=31 // pred_region
          %p238 = scmp.lt.s32.totalorder %s22, 1
          %s239 = scalar_select %p238, %s22, 1
          %s240 = smul.addr %s239, 8
          %s241 = scalar_lea.vmem %s1, %s240
        $region40: #{tpu_custom_call.1} parent=31 // pred_fallthru
          _
      $region32: #{tpu_custom_call.1} parent=5 // pred_fallthru
        _
      %p242 = scmp.le.s32.totalorder 1, %s15
      %p243 = scmp.lt.s32.totalorder %s15, 5
      %p244 = pnand %p242, %p243
      %p245 = pneg %p244
      // Predicated region
      $region41: #{tpu_custom_call.1} parent=5 // pred_check
        _
      $region42: #{tpu_custom_call.1} parent=5 // pred_check_branch
        %247 = sbr.rel (%p244) target = $region44
      $region43: #{tpu_custom_call.1} parent=5 // pred_region
        %s248 = ssub.s32 %s15, 1
        %p249 = scmp.lt.s32.totalorder %s24, 1
        %s250 = scalar_select %p249, %s24, 1
        %p251 = scmp.lt.s32.totalorder %s25, 1
        %s252 = scalar_select %p251, %s25, 1
        %s253 = smul.addr %s250, 2
        %s254 = sadd.s32 %s252, %s253
        %s255 = smul.addr %s254, 8
        %s256 = scalar_lea.vmem %s0, %s255
        %p257 = pneg %p55
        %p258 = pneg %p52
        %p259 = scmp.lt.s32.totalorder %s24, 1
        %s260 = scalar_select %p259, %s24, 1
        %s261 = smul.addr %s260, 8
        %s262 = scalar_lea.vmem %s1, %s261
        %p263 = pneg %p81
        %p264 = pneg %p78
        %p265 = pneg %p102
        %p266 = pneg %p99
        %p267 = pneg %p123
        %p268 = pneg %p120
        %p269 = pneg %p144
        %p270 = pneg %p141
        %p271 = pneg %p165
        %p272 = pneg %p162
        %p273 = pneg %p193
        %p274 = pneg %p190
        %s275 = sand.u32 %s180, 1
        %s276 = scalar_lea.sflag [#allocation3], %s275
        %s277 = sand.u32 %s180, 1
        %s278 = smul.addr %s277, 8
        %s279 = scalar_lea.vmem [#allocation2], %s278
        %p280 = scmp.lt.s32.totalorder %s24, 1
        %s281 = scalar_select %p280, %s24, 1
        %p282 = scmp.lt.s32.totalorder %s25, 1
        %s283 = scalar_select %p282, %s25, 1
        %s284 = smul.addr %s281, 2
        %s285 = sadd.s32 %s283, %s284
        %s286 = smul.addr %s285, 8
        %s287 = scalar_lea.vmem %s0, %s286
        %p288 = scmp.lt.s32.totalorder %s24, 1
        %s289 = scalar_select %p288, %s24, 1
        %s290 = smul.addr %s289, 8
        %s291 = scalar_lea.vmem %s1, %s290
        %v292 = vld [vmem:[%s287] sm:$0xff]
        %v293 = vld [vmem:[%s2] sm:$0x3]
        %v294 = vld [vmem:[%s3] sm:$0x3]
        %296 = vset.pattern.permute.xlu0 0
        %297 = vperm.xlu0 %296, %v294
        %v298 = vpop.permute.xlu0 %297
        %vm300 = vcmask 64512
        %v302 = vsel %vm300, %v293, 0
        %304 = vmatprep.subr.mxu0 0.0
        %305 = vmatpush1.msra.mxu0 0.0
        %306 = vmatprep.subr.mxu0 0.0
        %307 = vmatpush1.msra.mxu0 0.0
        %308 = vmatprep.subr.mxu0 0.0
        %309 = vmatpush1.msra.mxu0 0.0
        %310 = vmatprep.subr.mxu0 0.0
        %311 = vmatpush1.msra.mxu0 0.0
        %312 = vmatprep.subr.mxu0 0.0
        %313 = vmatpush1.msra.mxu0 0.0
        %314 = vmatprep.subr.mxu0 0.0
        %315 = vmatpush1.msra.mxu0 0.0
        %316 = vmatprep.subr.mxu0 0.0
        %317 = vmatpush1.msra.mxu0 0.0
        %318 = vmatprep.subr.mxu0 0.0
        %319 = vmatpush1.msra.mxu0 0.0
        %320 = vmatprep.subr.mxu0 0.0
        %321 = vmatpush1.msra.mxu0 0.0
        %322 = vmatprep.subr.mxu0 0.0
        %323 = vmatpush1.msra.mxu0 0.0
        %324 = vmatprep.subr.mxu0 0.0
        %325 = vmatpush1.msra.mxu0 0.0
        %326 = vmatprep.subr.mxu0 0.0
        %327 = vmatpush1.msra.mxu0 0.0
        %328 = vmatprep.subr.mxu0 0.0
        %329 = vmatpush1.msra.mxu0 0.0
        %330 = vmatprep.subr.mxu0 0.0
        %331 = vmatpush1.msra.mxu0 0.0
        %332 = vmatprep.subr.mxu0 0.0
        %333 = vmatpush1.msra.mxu0 0.0
        %334 = vmatprep.subr.mxu0 0.0
        %335 = vmatpush1.msra.mxu0 %v292
        %336 = vmatprep.subr.mxu0 0.0
        %337 = vmatpush2.msra.mxu0 0.0
        %338 = vmatprep.subr.mxu0 0.0
        %339 = vmatpush2.msra.mxu0 0.0
        %340 = vmatprep.subr.mxu0 0.0
        %341 = vmatpush2.msra.mxu0 0.0
        %342 = vmatprep.subr.mxu0 0.0
        %343 = vmatpush2.msra.mxu0 0.0
        %344 = vmatprep.subr.mxu0 0.0
        %345 = vmatpush2.msra.mxu0 0.0
        %346 = vmatprep.subr.mxu0 0.0
        %347 = vmatpush2.msra.mxu0 0.0
        %348 = vmatprep.subr.mxu0 0.0
        %349 = vmatpush2.msra.mxu0 0.0
        %350 = vmatprep.subr.mxu0 0.0
        %351 = vmatpush2.msra.mxu0 0.0
        %352 = vmatprep.subr.mxu0 0.0
        %353 = vmatpush2.msra.mxu0 0.0
        %354 = vmatprep.subr.mxu0 0.0
        %355 = vmatpush2.msra.mxu0 0.0
        %356 = vmatprep.subr.mxu0 0.0
        %357 = vmatpush2.msra.mxu0 0.0
        %358 = vmatprep.subr.mxu0 0.0
        %359 = vmatpush2.msra.mxu0 0.0
        %360 = vmatprep.subr.mxu0 0.0
        %361 = vmatpush2.msra.mxu0 0.0
        %362 = vmatprep.subr.mxu0 0.0
        %363 = vmatpush2.msra.mxu0 0.0
        %364 = vmatprep.subr.mxu0 0.0
        %365 = vmatpush2.msra.mxu0 0.0
        %366 = vmatprep.subr.mxu0 0.0
        %367 = vmatpush2.msra.mxu0 0.0
        %368 = vmatprep.mubr.f32.mxu0 0.0
        %369 = vmatmul.mubr.f32.gmra.mxu0 %v302
        %v370 = vpop.f32.mrf.mxu0
        %v371 = vadd.f32 %v298, %v370
        %v372 = vpop.f32.mrf.mxu0
        %373 = vdwg.mxu0
        %v374 = vmax.f32 %v371, 0.0
        %v375 = vld [vmem:[%s4] sm:$0xff]
        %v376 = vld [vmem:[%s5] sm:$0xff]
        %378 = vset.pattern.permute.xlu0 0
        %379 = vperm.xlu0 %378, %v376
        %v380 = vpop.permute.xlu0 %379
        %vm382 = vcmask 15360
        %v384 = vsel %vm382, %v375, 0
        %vm386 = vcmask 1041408
        %v388 = vsel %vm386, %v374, 0
        %390 = vmatprep.subr.mxu0 0.0
        %391 = vmatpush1.msra.mxu0 0.0
        %392 = vmatprep.subr.mxu0 0.0
        %393 = vmatpush1.msra.mxu0 0.0
        %394 = vmatprep.subr.mxu0 0.0
        %395 = vmatpush1.msra.mxu0 0.0
        %396 = vmatprep.subr.mxu0 0.0
        %397 = vmatpush1.msra.mxu0 0.0
        %398 = vmatprep.subr.mxu0 0.0
        %399 = vmatpush1.msra.mxu0 0.0
        %400 = vmatprep.subr.mxu0 0.0
        %401 = vmatpush1.msra.mxu0 0.0
        %402 = vmatprep.subr.mxu0 0.0
        %403 = vmatpush1.msra.mxu0 0.0
        %404 = vmatprep.subr.mxu0 0.0
        %405 = vmatpush1.msra.mxu0 0.0
        %406 = vmatprep.subr.mxu0 0.0
        %407 = vmatpush1.msra.mxu0 0.0
        %408 = vmatprep.subr.mxu0 0.0
        %409 = vmatpush1.msra.mxu0 0.0
        %410 = vmatprep.subr.mxu0 0.0
        %411 = vmatpush1.msra.mxu0 0.0
        %412 = vmatprep.subr.mxu0 0.0
        %413 = vmatpush1.msra.mxu0 0.0
        %414 = vmatprep.subr.mxu0 0.0
        %415 = vmatpush1.msra.mxu0 0.0
        %416 = vmatprep.subr.mxu0 0.0
        %417 = vmatpush1.msra.mxu0 0.0
        %418 = vmatprep.subr.mxu0 0.0
        %419 = vmatpush1.msra.mxu0 0.0
        %420 = vmatprep.subr.mxu0 0.0
        %421 = vmatpush1.msra.mxu0 %v388
        %422 = vmatprep.subr.mxu0 0.0
        %423 = vmatpush2.msra.mxu0 0.0
        %424 = vmatprep.subr.mxu0 0.0
        %425 = vmatpush2.msra.mxu0 0.0
        %426 = vmatprep.subr.mxu0 0.0
        %427 = vmatpush2.msra.mxu0 0.0
        %428 = vmatprep.subr.mxu0 0.0
        %429 = vmatpush2.msra.mxu0 0.0
        %430 = vmatprep.subr.mxu0 0.0
        %431 = vmatpush2.msra.mxu0 0.0
        %432 = vmatprep.subr.mxu0 0.0
        %433 = vmatpush2.msra.mxu0 0.0
        %434 = vmatprep.subr.mxu0 0.0
        %435 = vmatpush2.msra.mxu0 0.0
        %436 = vmatprep.subr.mxu0 0.0
        %437 = vmatpush2.msra.mxu0 0.0
        %438 = vmatprep.subr.mxu0 0.0
        %439 = vmatpush2.msra.mxu0 0.0
        %440 = vmatprep.subr.mxu0 0.0
        %441 = vmatpush2.msra.mxu0 0.0
        %442 = vmatprep.subr.mxu0 0.0
        %443 = vmatpush2.msra.mxu0 0.0
        %444 = vmatprep.subr.mxu0 0.0
        %445 = vmatpush2.msra.mxu0 0.0
        %446 = vmatprep.subr.mxu0 0.0
        %447 = vmatpush2.msra.mxu0 0.0
        %448 = vmatprep.subr.mxu0 0.0
        %449 = vmatpush2.msra.mxu0 0.0
        %450 = vmatprep.subr.mxu0 0.0
        %451 = vmatpush2.msra.mxu0 0.0
        %452 = vmatprep.subr.mxu0 0.0
        %453 = vmatpush2.msra.mxu0 0.0
        %454 = vmatprep.mubr.f32.mxu0 0.0
        %455 = vmatmul.mubr.f32.gmra.mxu0 %v384
        %v456 = vpop.f32.mrf.mxu0
        %v457 = vadd.f32 %v380, %v456
        %v458 = vpop.f32.mrf.mxu0
        %459 = vdwg.mxu0
        %v460 = vld [vmem:[%s291] sm:$0xff]
        %462 = vset.pattern.permute.xlu0 0
        %463 = vperm.xlu0 %462, %v460
        %v464 = vpop.permute.xlu0 %463
        %v466 = vadd.f32 %v457, %v464
        %v467 = vxor.u32 %v466, 2147483648
        %v468 = vmul.f32 %v467, 1.442695
        %v469 = vpow.pop %v468
        %v470 = vadd.f32 %v469, 1.0
        %v471 = vrcp.pop %v470
        %v472 = vmul.f32 1.0, %v471
        %v473 = vmul.f32 %v292, %v472
        %474 = vst [vmem:[%s279] sm:$0xff] %v473
        %s475 = sand.u32 %s180, 1
        %s476 = scalar_lea.sflag [#allocation3], %s475
        %s477 = sand.u32 %s180, 1
        %s478 = smul.addr %s477, 8
        %s479 = scalar_lea.vmem [#allocation2], %s478
        // Predicated region
        $region45: #{tpu_custom_call.1} parent=43 // pred_check
          %p480 = pneg %p190
        $region46: #{tpu_custom_call.1} parent=43 // pred_check_branch
          %482 = sbr.rel (%p480) target = $region48
        $region47: #{tpu_custom_call.1} parent=43 // pred_region
          %s484 = ssub.s32 128, 128
          %485 = vsyncadd %s476, %s484
          %s486 = smul.addr %s24, 2
          %s487 = sadd.s32 %s25, %s486
          %s488 = smul.addr %s487, 128
          %s489 = scalar_lea.hbm %s6, %s488
          %s491 = sshll.u32 %s479, 4
          %s492 = int_to_ptr.vmem [resolvable:$true] %s491
          %494 = dma.vmem_to_hbm [thread:$0]  %s492, 128, %s489, %s476
        $region48: #{tpu_custom_call.1} parent=43 // pred_fallthru
          _
      $region44: #{tpu_custom_call.1} parent=5 // pred_fallthru
        _
      %p495 = scmp.le.s32.totalorder 2, %s15
      // Predicated region
      $region49: #{tpu_custom_call.1} parent=5 // pred_check
        %p496 = pneg %p495
      $region50: #{tpu_custom_call.1} parent=5 // pred_check_branch
        %498 = sbr.rel (%p496) target = $region52
      $region51: #{tpu_custom_call.1} parent=5 // pred_region
        %s499 = ssub.s32 %s15, 2
        // Predicated region
        $region53: #{tpu_custom_call.1} parent=51 // pred_check
          %p500 = pneg %p196
        $region54: #{tpu_custom_call.1} parent=51 // pred_check_branch
          %502 = sbr.rel (%p500) target = $region56
        $region55: #{tpu_custom_call.1} parent=51 // pred_region
          %s503 = sand.u32 %s181, 1
          %s504 = scalar_lea.sflag [#allocation3], %s503
          %s505 = sand.u32 %s181, 1
          %s506 = smul.addr %s505, 8
          %s507 = scalar_lea.vmem [#allocation2], %s506
          %508 = dma.done %s504, 128
        $region56: #{tpu_custom_call.1} parent=51 // pred_fallthru
          _
      $region52: #{tpu_custom_call.1} parent=5 // pred_fallthru
        _
    $region6: #{tpu_custom_call.1} parent=1 // loop_footer
      %s19 = sadd.s32 1, %s15
    $region7: #{tpu_custom_call.1} parent=1 // loop_footer_branch
      %14 = sbr.rel target = $region3
    $region8: #{tpu_custom_call.1} parent=1 // loop_exit
      _
    %509 = vsyncpa [#allocation3], 1
    %s510 = scalar_lea.sflag [#allocation3], 1
    %511 = vsyncpa %s510, 1

</llo_original>
